<compile_context>
chip_gen: v5e
topology: v5e:2x2
jax: 0.10.0
libtpu: 0.0.40
codegen_flags: <defaults>
</compile_context>

<pallas_src>
import jax
import jax.numpy as jnp
from jax import lax
from jax.experimental import pallas as pl
from jax.experimental.pallas import tpu as pltpu

BN_EPS = 1e-5
LRELU_SLOPE = 0.2
_VMEM_LIMIT = 32 * 1024 * 1024   # safe on v5e/v6e (128 MiB phys) and v7x (64 MiB phys)
_TILE_CAP = 2048                 # lanes per pixel tile (amortizes ~0.35us/step overhead)


def _leaky_relu(x):
    # LeakyReLU with slope in (0, 1): max(x, slope * x).
    return jnp.maximum(x, LRELU_SLOPE * x)


def _conv_stack(x_ref, w1_ref, b1_ref, w2_ref):
    """conv1 (bias) + LeakyReLU + conv2 on one (cin, tile) block.

    bf16 MXU operands, f32 accumulation; elementwise math in f32.
    """
    x = x_ref[...].astype(jnp.bfloat16)                       # stream dtype -> bf16
    h1 = jnp.dot(w1_ref[...], x, preferred_element_type=jnp.float32)
    h1 = _leaky_relu(h1 + b1_ref[...])                        # f32 bias + activation
    h2 = jnp.dot(w2_ref[...], h1.astype(jnp.bfloat16),
                 preferred_element_type=jnp.float32)
    return h2                                                  # (ndf2, tile) f32


def bn_stats_kernel(x_ref, w1_ref, b1_ref, w2_ref, sum_ref, sumsq_ref):
    """Pass 1: accumulate per-channel sum / sum-of-squares of h2 over all pixels."""
    @pl.when((pl.program_id(0) == 0) & (pl.program_id(1) == 0))
    def _():
        sum_ref[...] = jnp.zeros_like(sum_ref)
        sumsq_ref[...] = jnp.zeros_like(sumsq_ref)

    h2 = _conv_stack(x_ref, w1_ref, b1_ref, w2_ref)
    # Per-tile partial sums (lane reduce), then f32 add into the resident accumulator.
    sum_ref[...] += jnp.sum(h2, axis=1, keepdims=True)
    sumsq_ref[...] += jnp.sum(h2 * h2, axis=1, keepdims=True)


def bn_apply_kernel(x_ref, w1_ref, b1_ref, w2_ref, scale_ref, shift_ref, w3_ref,
                    out_ref):
    """Pass 2: recompute h1/h2, apply folded BN + LeakyReLU + final Cout=1 conv."""
    h2 = _conv_stack(x_ref, w1_ref, b1_ref, w2_ref)
    h2 = _leaky_relu(h2 * scale_ref[...] + shift_ref[...])     # BN(affine) + LeakyReLU

    # Conv2d(ndf2 -> 1): VPU multiply, tree-add over sublane groups (vreg adds),
    # then a single 8-sublane XLU reduce.  Keeps the XLU off the critical path.
    h2w = h2 * w3_ref[...]
    ndf2 = h2w.shape[0]
    if ndf2 % 8 == 0 and ndf2 > 8:
        acc = h2w[0:8, :]
        for g in range(1, ndf2 // 8):                          # static, unrolled
            acc = acc + h2w[g * 8:(g + 1) * 8, :]
        out = jnp.sum(acc, axis=0, keepdims=True)
    else:
        out = jnp.sum(h2w, axis=0, keepdims=True)
    # TODO(synk): (1, tile) store writes 1 of 8 sublanes (masked vst); if writeback ever
    # shows in the profile, pack 8 rows into an (8, tile) scratch before storing.
    out_ref[...] = out.astype(out_ref.dtype)
    # use_sigmoid=False in the reference config -> no sigmoid.


def _choose_tile(hw, cap=_TILE_CAP):
    """Largest pixel tile that divides H*W, is a multiple of 128, and fits the cap."""
    if hw <= cap:
        return hw
    t = (cap // 128) * 128
    while t >= 128:
        if hw % t == 0:
            return t
        t -= 128
    # TODO(synk): pad/mask ragged spatial sizes instead of one whole-image block.
    return hw


def pixel_discriminator_forward(x_nchw, w1, b1, w2, gamma, beta, w3):
    """PixelDiscriminator forward.  NCHW input -> (N, 1, H, W) float32 output.

    w1: (ndf, Cin), b1: (ndf,), w2: (ndf2, ndf), gamma/beta: (ndf2,), w3: (1, ndf2)
    (the squeezed 1x1 Conv2d / BatchNorm2d parameters).
    """
    n, cin, h, w = x_nchw.shape
    hw = h * w
    m_total = n * hw
    ndf = w1.shape[0]
    ndf2 = w2.shape[0]

    tile = _choose_tile(hw)
    n_tiles = hw // tile

    # Free reshape only: channels stay on sublanes, pixels land lane-dense in each block.
    # No host transpose, no host dtype cast of the image (cast to bf16 happens in-kernel).
    x3d = x_nchw.reshape(n, cin, hw)
    w1b = w1.astype(jnp.bfloat16)
    b1c = b1.reshape(ndf, 1).astype(jnp.float32)
    w2b = w2.astype(jnp.bfloat16)

    x_spec = pl.BlockSpec((pl.Squeezed(), cin, tile), lambda i, t: (i, 0, t))
    w1_spec = pl.BlockSpec((ndf, cin), lambda i, t: (0, 0))
    b1_spec = pl.BlockSpec((ndf, 1), lambda i, t: (0, 0))
    w2_spec = pl.BlockSpec((ndf2, ndf), lambda i, t: (0, 0))
    vec_spec = pl.BlockSpec((ndf2, 1), lambda i, t: (0, 0))

    itemsize = x_nchw.dtype.itemsize

    # ---- Pass 1: BatchNorm batch statistics ------------------------------------
    stats_flops = int(2 * m_total * (cin * ndf + ndf * ndf2) + 4 * m_total * ndf2)
    stats_bytes = int(itemsize * cin * m_total + 2 * (w1.size + w2.size)
                      + 4 * (ndf + 2 * ndf2))
    sums, sumsq = pl.pallas_call(
        bn_stats_kernel,
        out_shape=(jax.ShapeDtypeStruct((ndf2, 1), jnp.float32),
                   jax.ShapeDtypeStruct((ndf2, 1), jnp.float32)),
        grid=(n, n_tiles),
        in_specs=[x_spec, w1_spec, b1_spec, w2_spec],
        out_specs=(vec_spec, vec_spec),
        compiler_params=pltpu.CompilerParams(
            dimension_semantics=("arbitrary", "arbitrary"),
            vmem_limit_bytes=_VMEM_LIMIT),
        cost_estimate=pl.CostEstimate(flops=stats_flops, transcendentals=0,
                                      bytes_accessed=stats_bytes),
    )(x3d, w1b, b1c, w2b)

    # Tiny O(channels) BN folding between the passes (plain XLA).
    inv_m = 1.0 / float(m_total)
    mean = sums * inv_m
    var = jnp.maximum(sumsq * inv_m - mean * mean, 0.0)   # clamp: guards cancellation
    scale = gamma.reshape(ndf2, 1).astype(jnp.float32) * lax.rsqrt(var + BN_EPS)
    shift = beta.reshape(ndf2, 1).astype(jnp.float32) - mean * scale
    w3c = w3.reshape(ndf2, 1).astype(jnp.float32)
    # TODO(synk): PyTorch training-mode BatchNorm2d also EMA-updates running_mean/var
    # buffers; forward output does not need them, so they are not maintained here.

    # ---- Pass 2: recompute + apply (both grid axes parallel; 2x on v7x) ---------
    apply_flops = int(2 * m_total * (cin * ndf + ndf * ndf2 + ndf2)
                      + 8 * m_total * ndf2)
    apply_bytes = int(itemsize * cin * m_total + 4 * m_total
                      + 2 * (w1.size + w2.size) + 4 * (ndf + 4 * ndf2))
    out3d = pl.pallas_call(
        bn_apply_kernel,
        out_shape=jax.ShapeDtypeStruct((n, 1, hw), jnp.float32),
        grid=(n, n_tiles),
        in_specs=[x_spec, w1_spec, b1_spec, w2_spec, vec_spec, vec_spec, vec_spec],
        out_specs=pl.BlockSpec((pl.Squeezed(), 1, tile), lambda i, t: (i, 0, t)),
        compiler_params=pltpu.CompilerParams(
            dimension_semantics=("parallel", "parallel"),
            vmem_limit_bytes=_VMEM_LIMIT),
        cost_estimate=pl.CostEstimate(flops=apply_flops, transcendentals=0,
                                      bytes_accessed=apply_bytes),
    )(x3d, w1b, b1c, w2b, scale, shift, w3c)

    # (N, 1, H*W) -> (N, 1, H, W): free reshape.
    return out3d.reshape(n, 1, h, w)


# ---------------------------------------------------------------------------
# References for the correctness check.
# ---------------------------------------------------------------------------
def pixel_discriminator_reference(x_nchw, w1, b1, w2, gamma, beta, w3):
    """Module-semantics reference: pure f32, HIGHEST precision (mirrors PyTorch)."""
    x = x_nchw.astype(jnp.float32)
    hp = lax.Precision.HIGHEST

    def conv1x1(t, wt):
        return jnp.einsum('oc,nchw->nohw', wt, t, precision=hp)

    hh = conv1x1(x, w1) + b1.reshape(1, -1, 1, 1)
    hh = jnp.where(hh >= 0, hh, LRELU_SLOPE * hh)
    hh = conv1x1(hh, w2)
    mean = jnp.mean(hh, axis=(0, 2, 3), keepdims=True)
    var = jnp.mean((hh - mean) ** 2, axis=(0, 2, 3), keepdims=True)
    hh = (hh - mean) * lax.rsqrt(var + BN_EPS)
    hh = hh * gamma.reshape(1, -1, 1, 1) + beta.reshape(1, -1, 1, 1)
    hh = jnp.where(hh >= 0, hh, LRELU_SLOPE * hh)
    return conv1x1(hh, w3)


def pixel_discriminator_matched_reference(x_nchw, w1, b1, w2, gamma, beta, w3):
    """Precision-matched reference: mirrors the kernel's bf16-operand / f32-accum math."""
    n, cin, h, w = x_nchw.shape
    m = n * h * w
    x2d = jnp.transpose(x_nchw, (1, 0, 2, 3)).reshape(cin, m)
    h1 = jnp.dot(w1.astype(jnp.bfloat16), x2d.astype(jnp.bfloat16),
                 preferred_element_type=jnp.float32) + b1.reshape(-1, 1)
    h1 = jnp.maximum(h1, LRELU_SLOPE * h1)
    h2 = jnp.dot(w2.astype(jnp.bfloat16), h1.astype(jnp.bfloat16),
                 preferred_element_type=jnp.float32)
    s = jnp.sum(h2, axis=1, keepdims=True)
    ss = jnp.sum(h2 * h2, axis=1, keepdims=True)
    mean = s / m
    var = jnp.maximum(ss / m - mean * mean, 0.0)
    scale = gamma.reshape(-1, 1) * lax.rsqrt(var + BN_EPS)
    shift = beta.reshape(-1, 1) - mean * scale
    h2 = h2 * scale + shift
    h2 = jnp.maximum(h2, LRELU_SLOPE * h2)
    out = jnp.sum(h2 * w3.reshape(-1, 1), axis=0, keepdims=True)   # (1, m)
    return out.reshape(n, 1, h, w)


if __name__ == "__main__":
    # Small shapes consistent with the module: N=2, input_nc=4, 16x16, ndf=8 (-> ndf*2=16).
    N, CIN, H, W = 2, 4, 16, 16
    NDF = 8
    NDF2 = 2 * NDF

    key = jax.random.PRNGKey(0)
    kx, k1, kb, k2, kg, kbt, k3 = jax.random.split(key, 7)

    x = jax.random.normal(kx, (N, CIN, H, W), dtype=jnp.float32)
    # PyTorch Conv2d 1x1 weights are (Cout, Cin, 1, 1); passed here squeezed to 2-D.
    w1 = 0.5 * jax.random.normal(k1, (NDF, CIN), dtype=jnp.float32)
    b1 = 0.1 * jax.random.normal(kb, (NDF,), dtype=jnp.float32)
    w2 = 0.3 * jax.random.normal(k2, (NDF2, NDF), dtype=jnp.float32)
    gamma = 1.0 + 0.1 * jax.random.normal(kg, (NDF2,), dtype=jnp.float32)   # BN weight
    beta = 0.05 * jax.random.normal(kbt, (NDF2,), dtype=jnp.float32)        # BN bias
    w3 = 0.25 * jax.random.normal(k3, (1, NDF2), dtype=jnp.float32)

    out = jax.block_until_ready(
        pixel_discriminator_forward(x, w1, b1, w2, gamma, beta, w3))
    matched = jax.block_until_ready(
        pixel_discriminator_matched_reference(x, w1, b1, w2, gamma, beta, w3))
    ref = jax.block_until_ready(
        pixel_discriminator_reference(x, w1, b1, w2, gamma, beta, w3))

    assert out.shape == (N, 1, H, W), out.shape

    # Tight check against the precision-matched (bf16-operand) reference: catches logic bugs.
    err_matched = float(jnp.max(jnp.abs(out - matched)))
    assert jnp.allclose(out, matched, rtol=1e-3, atol=1e-3), err_matched

    # Loose check against the module-semantics f32 reference: tolerance covers the
    # bf16 MXU operands vs the HIGHEST-precision XLA reference.
    err_ref = float(jnp.max(jnp.abs(out - ref)))
    assert jnp.allclose(out, ref, rtol=5e-2, atol=5e-2), err_ref

    print("KERNEL_OK")
</pallas_src>

<mosaic_0001>
module attributes {stable_mosaic.version = 11 : i64} {
  func.func @bn_stats_kernel(%arg0: i32, %arg1: i32, %arg2: memref<1x4x256xf32, #tpu.memory_space<vmem>>, %arg3: memref<8x4xbf16, #tpu.memory_space<vmem>>, %arg4: memref<8x1xf32, #tpu.memory_space<vmem>>, %arg5: memref<16x8xbf16, #tpu.memory_space<vmem>>, %arg6: memref<16x1xf32, #tpu.memory_space<vmem>>, %arg7: memref<16x1xf32, #tpu.memory_space<vmem>>) attributes {dimension_semantics = [#tpu.dimension_semantics<arbitrary>, #tpu.dimension_semantics<arbitrary>], iteration_bounds = array<i64: 2, 1>, scalar_prefetch = 0 : i64, scratch_operands = 0 : i64, tpu.core_type = #tpu.core_type<tc>, window_params = [{transform_indices = @transform_0, window_bounds = array<i64: 1, 4, 256>}, {pipeline_mode = #tpu.pipeline_mode<synchronous>, transform_indices = @transform_1, window_bounds = array<i64: 8, 4>}, {pipeline_mode = #tpu.pipeline_mode<synchronous>, transform_indices = @transform_2, window_bounds = array<i64: 8, 1>}, {pipeline_mode = #tpu.pipeline_mode<synchronous>, transform_indices = @transform_3, window_bounds = array<i64: 16, 8>}, {pipeline_mode = #tpu.pipeline_mode<synchronous>, transform_indices = @transform_4, window_bounds = array<i64: 16, 1>}, {pipeline_mode = #tpu.pipeline_mode<synchronous>, transform_indices = @transform_5, window_bounds = array<i64: 16, 1>}]} {
    %c0_i32 = arith.constant 0 : i32
    %0 = arith.cmpi eq, %arg0, %c0_i32 : i32
    %c0_i32_0 = arith.constant 0 : i32
    %1 = arith.cmpi eq, %arg1, %c0_i32_0 : i32
    %2 = arith.andi %0, %1 : i1
    %3 = arith.extui %2 : i1 to i32
    %c0_i32_1 = arith.constant 0 : i32
    %4 = arith.cmpi ne, %3, %c0_i32_1 : i32
    scf.if %4 {
      %cst_22 = arith.constant 0.000000e+00 : f32
      %30 = vector.broadcast %cst_22 : f32 to vector<16x1xf32>
      %c0_23 = arith.constant 0 : index
      %c0_24 = arith.constant 0 : index
      %31 = vector.load %arg6[%c0_23, %c0_24] : memref<16x1xf32, #tpu.memory_space<vmem>>, vector<16x1xf32>
      tpu.vector_store %arg6[%c0_23, %c0_24], %30 {strides = array<i32>} : memref<16x1xf32, #tpu.memory_space<vmem>>, vector<16x1xf32>,
      %cst_25 = arith.constant 0.000000e+00 : f32
      %32 = vector.broadcast %cst_25 : f32 to vector<16x1xf32>
      %c0_26 = arith.constant 0 : index
      %c0_27 = arith.constant 0 : index
      %33 = vector.load %arg7[%c0_26, %c0_27] : memref<16x1xf32, #tpu.memory_space<vmem>>, vector<16x1xf32>
      tpu.vector_store %arg7[%c0_26, %c0_27], %32 {strides = array<i32>} : memref<16x1xf32, #tpu.memory_space<vmem>>, vector<16x1xf32>,
    } else {
    }
    %c0 = arith.constant 0 : index
    %c0_2 = arith.constant 0 : index
    %c0_3 = arith.constant 0 : index
    %5 = vector.load %arg2[%c0, %c0_2, %c0_3] : memref<1x4x256xf32, #tpu.memory_space<vmem>>, vector<1x4x256xf32>
    %6 = vector.shape_cast %5 : vector<1x4x256xf32> to vector<4x256xf32>
    %7 = arith.truncf %6 : vector<4x256xf32> to vector<4x256xbf16>
    %c0_4 = arith.constant 0 : index
    %c0_5 = arith.constant 0 : index
    %8 = vector.load %arg3[%c0_4, %c0_5] : memref<8x4xbf16, #tpu.memory_space<vmem>>, vector<8x4xbf16>
    %cst = arith.constant dense<0.000000e+00> : vector<8x256xf32>
    %9 = tpu.matmul %8, %7, %cst {dimension_numbers = #tpu.dot_dimension_numbers<[1], [0], [0], [1], [0, 0, 1, 1], [], []>} : vector<8x4xbf16>, vector<4x256xbf16>, vector<8x256xf32> -> vector<8x256xf32>
    %c0_6 = arith.constant 0 : index
    %c0_7 = arith.constant 0 : index
    %10 = vector.load %arg4[%c0_6, %c0_7] : memref<8x1xf32, #tpu.memory_space<vmem>>, vector<8x1xf32>
    %11 = vector.broadcast %10 : vector<8x1xf32> to vector<8x256xf32>
    %12 = arith.addf %9, %11 : vector<8x256xf32>
    %cst_8 = arith.constant 2.000000e-01 : f32
    %13 = vector.broadcast %cst_8 : f32 to vector<8x256xf32>
    %14 = arith.mulf %13, %12 : vector<8x256xf32>
    %15 = arith.maximumf %12, %14 : vector<8x256xf32>
    %c0_9 = arith.constant 0 : index
    %c0_10 = arith.constant 0 : index
    %16 = vector.load %arg5[%c0_9, %c0_10] : memref<16x8xbf16, #tpu.memory_space<vmem>>, vector<16x8xbf16>
    %17 = arith.truncf %15 : vector<8x256xf32> to vector<8x256xbf16>
    %cst_11 = arith.constant dense<0.000000e+00> : vector<16x256xf32>
    %18 = tpu.matmul %16, %17, %cst_11 {dimension_numbers = #tpu.dot_dimension_numbers<[1], [0], [0], [1], [0, 0, 1, 1], [], []>} : vector<16x8xbf16>, vector<8x256xbf16>, vector<16x256xf32> -> vector<16x256xf32>
    %c0_12 = arith.constant 0 : index
    %c0_13 = arith.constant 0 : index
    %19 = vector.load %arg6[%c0_12, %c0_13] : memref<16x1xf32, #tpu.memory_space<vmem>>, vector<16x1xf32>
    %cst_14 = arith.constant dense<0.000000e+00> : vector<16xf32>
    %20 = vector.multi_reduction <add>, %18, %cst_14 [1] : vector<16x256xf32> to vector<16xf32>
    %21 = vector.shape_cast %20 : vector<16xf32> to vector<16x1xf32>
    %22 = arith.addf %19, %21 : vector<16x1xf32>
    %c0_15 = arith.constant 0 : index
    %c0_16 = arith.constant 0 : index
    %23 = vector.load %arg6[%c0_15, %c0_16] : memref<16x1xf32, #tpu.memory_space<vmem>>, vector<16x1xf32>
    tpu.vector_store %arg6[%c0_15, %c0_16], %22 {strides = array<i32>} : memref<16x1xf32, #tpu.memory_space<vmem>>, vector<16x1xf32>,
    %c0_17 = arith.constant 0 : index
    %c0_18 = arith.constant 0 : index
    %24 = vector.load %arg7[%c0_17, %c0_18] : memref<16x1xf32, #tpu.memory_space<vmem>>, vector<16x1xf32>
    %25 = arith.mulf %18, %18 : vector<16x256xf32>
    %cst_19 = arith.constant dense<0.000000e+00> : vector<16xf32>
    %26 = vector.multi_reduction <add>, %25, %cst_19 [1] : vector<16x256xf32> to vector<16xf32>
    %27 = vector.shape_cast %26 : vector<16xf32> to vector<16x1xf32>
    %28 = arith.addf %24, %27 : vector<16x1xf32>
    %c0_20 = arith.constant 0 : index
    %c0_21 = arith.constant 0 : index
    %29 = vector.load %arg7[%c0_20, %c0_21] : memref<16x1xf32, #tpu.memory_space<vmem>>, vector<16x1xf32>
    tpu.vector_store %arg7[%c0_20, %c0_21], %28 {strides = array<i32>} : memref<16x1xf32, #tpu.memory_space<vmem>>, vector<16x1xf32>,
    return
  }
  func.func @transform_0(%arg0: i32, %arg1: i32) -> (i32, i32, i32) {
    %c0_i32 = arith.constant 0 : i32
    %c0_i32_0 = arith.constant 0 : i32
    return %arg0, %c0_i32, %arg1 : i32, i32, i32
  }
  func.func @transform_1(%arg0: i32, %arg1: i32) -> (i32, i32) {
    %c0_i32 = arith.constant 0 : i32
    %c0_i32_0 = arith.constant 0 : i32
    %c0_i32_1 = arith.constant 0 : i32
    return %c0_i32, %c0_i32_0 : i32, i32
  }
  func.func @transform_2(%arg0: i32, %arg1: i32) -> (i32, i32) {
    %c0_i32 = arith.constant 0 : i32
    %c0_i32_0 = arith.constant 0 : i32
    %c0_i32_1 = arith.constant 0 : i32
    return %c0_i32, %c0_i32_0 : i32, i32
  }
  func.func @transform_3(%arg0: i32, %arg1: i32) -> (i32, i32) {
    %c0_i32 = arith.constant 0 : i32
    %c0_i32_0 = arith.constant 0 : i32
    %c0_i32_1 = arith.constant 0 : i32
    return %c0_i32, %c0_i32_0 : i32, i32
  }
  func.func @transform_4(%arg0: i32, %arg1: i32) -> (i32, i32) {
    %c0_i32 = arith.constant 0 : i32
    %c0_i32_0 = arith.constant 0 : i32
    %c0_i32_1 = arith.constant 0 : i32
    return %c0_i32, %c0_i32_0 : i32, i32
  }
  func.func @transform_5(%arg0: i32, %arg1: i32) -> (i32, i32) {
    %c0_i32 = arith.constant 0 : i32
    %c0_i32_0 = arith.constant 0 : i32
    %c0_i32_1 = arith.constant 0 : i32
    return %c0_i32, %c0_i32_0 : i32, i32
  }
}

</mosaic_0001>

<llo_original>
// kernel: tpu_custom_call.1
$region0: #{tpu_custom_call.1}
  #allocation0 [shape = 'u32[]', space=smem, size = 0x4, offset = 0x4, fixed_abs, tag = 'smem constant byte address 0x4 - core index']
  #allocation1 [shape = 'u32[72,128]{1,0:T(1,128)}', space=vmem, size = 0x9000, scoped, tag = 'internal scratch']
  %s0 = inlined_call_operand.vmem [shape: f32[2,4,256], index: 0, kind: input, shape index: {}]
  %s1 = inlined_call_operand.vmem [shape: bf16[8,4], index: 1, kind: input, shape index: {}]
  %s2 = inlined_call_operand.vmem [shape: f32[8,1], index: 2, kind: input, shape index: {}]
  %s3 = inlined_call_operand.vmem [shape: bf16[16,8], index: 3, kind: input, shape index: {}]
  %s4 = inlined_call_operand.vmem [shape: f32[16,1], index: 4, kind: output, shape index: {0}]
  %s5 = inlined_call_operand.vmem [shape: f32[16,1], index: 5, kind: output, shape index: {1}]
  %6 = xla_tuple %s4, %s5
  %s7 = sld [smem:[#allocation0]]
  $region61: #{tpu_custom_call.1} parent=0
    _
  %s9 = ssub.s32 1, %s7
  %s10 = scalar_select 0, %s9, %s7
  loop: start=0, step=1, limit=4
  $region2: #{tpu_custom_call.1} parent=0 // loop_pre_header
    _
  $region3: #{tpu_custom_call.1} parent=0 // loop_header
    %s12 = sphi 0, %s16
    %p13 = scmp.ge.s32.totalorder %s12, 4
    %s19 = sphi 0, %s31
    %s20 = sphi 0, %s27
    %s21 = sphi 0, %s19
    %s22 = sphi 0, %s20
    %s23 = sphi 0, %s21
    %s24 = sphi 0, %s22
    %s36 = sphi 0, %s38
    %s39 = sphi 0, %s36
    %s40 = sphi 0, %s39
    %s56 = sphi 0, %s40
    %s60 = sphi 0, %s60
    %s62 = sphi 0, %s60
    %s63 = sphi 0, %s62
    %s77 = sphi 0, %s63
    %s81 = sphi 0, %s81
    %s83 = sphi 0, %s81
    %s84 = sphi 0, %s83
    %s98 = sphi 0, %s84
    %s102 = sphi 0, %s102
    %s104 = sphi 0, %s102
    %s105 = sphi 0, %s104
    %s119 = sphi 0, %s105
    %s123 = sphi 0, %s123
    %s125 = sphi 0, %s123
    %s126 = sphi 0, %s125
    %s140 = sphi 0, %s126
    %s144 = sphi 0, %s144
    %s146 = sphi 0, %s144
    %s147 = sphi 0, %s146
    %s161 = sphi 0, %s147
  $region4: #{tpu_custom_call.1} parent=0 // loop_header_branch
    %15 = sbr.rel (%p13) target = $region8
  $region5: #{tpu_custom_call.1} parent=0 // loop_body
    %s17 = ssub.s32 %s12, 1
    %s18 = ssub.s32 %s12, 2
    %s25 = sadd.s32 1, %s20
    %p26 = scmp.ge.s32.totalorder %s25, 1
    %s27 = scalar_select %p26, 0, %s25
    %s28 = sadd.s32 1, %s19
    %s29 = scalar_select %p26, %s28, %s19
    %p30 = scmp.ge.s32.totalorder %s29, 2
    %s31 = scalar_select %p30, 0, %s29
    %s32 = ssub.s32 %s19, %s31
    %s33 = ssub.s32 %s20, %s27
    %s34 = sor.u32 %s32, %s33
    %p35 = scmp.eq.s32.totalorder %s34, 0
    %s37 = sadd.s32 %s36, 1
    %s38 = scalar_select %p35, %s36, %s37
    %p41 = pneg %p35
    %p42 = scmp.eq.s32.totalorder %s12, 1
    %p43 = por %p41, %p42
    %p44 = scmp.ne.s32.totalorder %s36, %s39
    %p45 = scmp.eq.s32.totalorder %s12, 0
    %p46 = por %p44, %p45
    %p47 = scmp.ne.s32.totalorder %s36, %s39
    %p48 = scmp.eq.s32.totalorder %s17, 1
    %p49 = por %p47, %p48
    %p50 = scmp.ne.s32.totalorder %s39, %s40
    %p51 = scmp.eq.s32.totalorder %s17, 0
    %p52 = por %p50, %p51
    %p53 = scmp.ne.s32.totalorder %s39, %s40
    %p54 = scmp.eq.s32.totalorder %s18, 1
    %p55 = por %p53, %p54
    %p57 = scmp.ne.s32.totalorder %s40, %s56
    %p58 = scmp.eq.s32.totalorder %s18, 0
    %p59 = por %p57, %p58
    %s61 = sadd.s32 %s60, 1
    %p64 = scmp.eq.s32.totalorder %s12, 1
    %p65 = scmp.ne.s32.totalorder %s60, %s62
    %p66 = scmp.eq.s32.totalorder %s12, 0
    %p67 = por %p65, %p66
    %p68 = scmp.ne.s32.totalorder %s60, %s62
    %p69 = scmp.eq.s32.totalorder %s17, 1
    %p70 = por %p68, %p69
    %p71 = scmp.ne.s32.totalorder %s62, %s63
    %p72 = scmp.eq.s32.totalorder %s17, 0
    %p73 = por %p71, %p72
    %p74 = scmp.ne.s32.totalorder %s62, %s63
    %p75 = scmp.eq.s32.totalorder %s18, 1
    %p76 = por %p74, %p75
    %p78 = scmp.ne.s32.totalorder %s63, %s77
    %p79 = scmp.eq.s32.totalorder %s18, 0
    %p80 = por %p78, %p79
    %s82 = sadd.s32 %s81, 1
    %p85 = scmp.eq.s32.totalorder %s12, 1
    %p86 = scmp.ne.s32.totalorder %s81, %s83
    %p87 = scmp.eq.s32.totalorder %s12, 0
    %p88 = por %p86, %p87
    %p89 = scmp.ne.s32.totalorder %s81, %s83
    %p90 = scmp.eq.s32.totalorder %s17, 1
    %p91 = por %p89, %p90
    %p92 = scmp.ne.s32.totalorder %s83, %s84
    %p93 = scmp.eq.s32.totalorder %s17, 0
    %p94 = por %p92, %p93
    %p95 = scmp.ne.s32.totalorder %s83, %s84
    %p96 = scmp.eq.s32.totalorder %s18, 1
    %p97 = por %p95, %p96
    %p99 = scmp.ne.s32.totalorder %s84, %s98
    %p100 = scmp.eq.s32.totalorder %s18, 0
    %p101 = por %p99, %p100
    %s103 = sadd.s32 %s102, 1
    %p106 = scmp.eq.s32.totalorder %s12, 1
    %p107 = scmp.ne.s32.totalorder %s102, %s104
    %p108 = scmp.eq.s32.totalorder %s12, 0
    %p109 = por %p107, %p108
    %p110 = scmp.ne.s32.totalorder %s102, %s104
    %p111 = scmp.eq.s32.totalorder %s17, 1
    %p112 = por %p110, %p111
    %p113 = scmp.ne.s32.totalorder %s104, %s105
    %p114 = scmp.eq.s32.totalorder %s17, 0
    %p115 = por %p113, %p114
    %p116 = scmp.ne.s32.totalorder %s104, %s105
    %p117 = scmp.eq.s32.totalorder %s18, 1
    %p118 = por %p116, %p117
    %p120 = scmp.ne.s32.totalorder %s105, %s119
    %p121 = scmp.eq.s32.totalorder %s18, 0
    %p122 = por %p120, %p121
    %s124 = sadd.s32 %s123, 1
    %p127 = scmp.eq.s32.totalorder %s12, 1
    %p128 = scmp.ne.s32.totalorder %s123, %s125
    %p129 = scmp.eq.s32.totalorder %s12, 0
    %p130 = por %p128, %p129
    %p131 = scmp.ne.s32.totalorder %s123, %s125
    %p132 = scmp.eq.s32.totalorder %s17, 1
    %p133 = por %p131, %p132
    %p134 = scmp.ne.s32.totalorder %s125, %s126
    %p135 = scmp.eq.s32.totalorder %s17, 0
    %p136 = por %p134, %p135
    %p137 = scmp.ne.s32.totalorder %s125, %s126
    %p138 = scmp.eq.s32.totalorder %s18, 1
    %p139 = por %p137, %p138
    %p141 = scmp.ne.s32.totalorder %s126, %s140
    %p142 = scmp.eq.s32.totalorder %s18, 0
    %p143 = por %p141, %p142
    %s145 = sadd.s32 %s144, 1
    %p148 = scmp.eq.s32.totalorder %s12, 1
    %p149 = scmp.ne.s32.totalorder %s144, %s146
    %p150 = scmp.eq.s32.totalorder %s12, 0
    %p151 = por %p149, %p150
    %p152 = scmp.ne.s32.totalorder %s144, %s146
    %p153 = scmp.eq.s32.totalorder %s17, 1
    %p154 = por %p152, %p153
    %p155 = scmp.ne.s32.totalorder %s146, %s147
    %p156 = scmp.eq.s32.totalorder %s17, 0
    %p157 = por %p155, %p156
    %p158 = scmp.ne.s32.totalorder %s146, %s147
    %p159 = scmp.eq.s32.totalorder %s18, 1
    %p160 = por %p158, %p159
    %p162 = scmp.ne.s32.totalorder %s147, %s161
    %p163 = scmp.eq.s32.totalorder %s18, 0
    %p164 = por %p162, %p163
    %p165 = scmp.le.s32.totalorder 1, %s12
    %p166 = scmp.lt.s32.totalorder %s12, 3
    %p167 = pnand %p165, %p166
    %p168 = pneg %p167
    // Predicated region
    $region9: #{tpu_custom_call.1} parent=5 // pred_check
      _
    $region10: #{tpu_custom_call.1} parent=5 // pred_check_branch
      %170 = sbr.rel (%p167) target = $region12
    $region11: #{tpu_custom_call.1} parent=5 // pred_region
      %s171 = ssub.s32 %s12, 1
      // Predicated region
      $region13: #{tpu_custom_call.1} parent=11 // pred_check
        %p172 = pneg %p73
      $region14: #{tpu_custom_call.1} parent=11 // pred_check_branch
        %174 = sbr.rel (%p172) target = $region16
      $region15: #{tpu_custom_call.1} parent=11 // pred_region
        _
      $region16: #{tpu_custom_call.1} parent=11 // pred_fallthru
        _
      // Predicated region
      $region17: #{tpu_custom_call.1} parent=11 // pred_check
        %p175 = pneg %p94
      $region18: #{tpu_custom_call.1} parent=11 // pred_check_branch
        %177 = sbr.rel (%p175) target = $region20
      $region19: #{tpu_custom_call.1} parent=11 // pred_region
        _
      $region20: #{tpu_custom_call.1} parent=11 // pred_fallthru
        _
      // Predicated region
      $region21: #{tpu_custom_call.1} parent=11 // pred_check
        %p178 = pneg %p115
      $region22: #{tpu_custom_call.1} parent=11 // pred_check_branch
        %180 = sbr.rel (%p178) target = $region24
      $region23: #{tpu_custom_call.1} parent=11 // pred_region
        _
      $region24: #{tpu_custom_call.1} parent=11 // pred_fallthru
        _
    $region12: #{tpu_custom_call.1} parent=5 // pred_fallthru
      _
    %p181 = scmp.lt.s32.totalorder %s12, 2
    // Predicated region
    $region25: #{tpu_custom_call.1} parent=5 // pred_check
      %p182 = pneg %p181
    $region26: #{tpu_custom_call.1} parent=5 // pred_check_branch
      %184 = sbr.rel (%p182) target = $region28
    $region27: #{tpu_custom_call.1} parent=5 // pred_region
      // Predicated region
      $region29: #{tpu_custom_call.1} parent=27 // pred_check
        %p185 = pneg %p46
      $region30: #{tpu_custom_call.1} parent=27 // pred_check_branch
        %187 = sbr.rel (%p185) target = $region32
      $region31: #{tpu_custom_call.1} parent=27 // pred_region
        %s188 = smul.u32 2, %s20
        %p189 = scmp.lt.s32.totalorder %s19, 1
        %s190 = scalar_select %p189, %s19, 1
        %p191 = scmp.lt.s32.totalorder %s188, 1
        %s192 = scalar_select %p191, %s188, 1
        %s193 = smul.addr %s190, 2
        %s194 = sadd.s32 %s192, %s193
        %s195 = smul.addr %s194, 4
        %s196 = scalar_lea.vmem %s0, %s195
        %s197 = smul.u32 2, %s20
      $region32: #{tpu_custom_call.1} parent=27 // pred_fallthru
        _
    $region28: #{tpu_custom_call.1} parent=5 // pred_fallthru
      _
    %p198 = scmp.le.s32.totalorder 1, %s12
    %p199 = scmp.lt.s32.totalorder %s12, 3
    %p200 = pnand %p198, %p199
    %p201 = pneg %p200
    // Predicated region
    $region33: #{tpu_custom_call.1} parent=5 // pred_check
      _
    $region34: #{tpu_custom_call.1} parent=5 // pred_check_branch
      %203 = sbr.rel (%p200) target = $region36
    $region35: #{tpu_custom_call.1} parent=5 // pred_region
      %s204 = ssub.s32 %s12, 1
      %s205 = smul.u32 2, %s22
      %p206 = scmp.lt.s32.totalorder %s21, 1
      %s207 = scalar_select %p206, %s21, 1
      %p208 = scmp.lt.s32.totalorder %s205, 1
      %s209 = scalar_select %p208, %s205, 1
      %s210 = smul.addr %s207, 2
      %s211 = sadd.s32 %s209, %s210
      %s212 = smul.addr %s211, 4
      %s213 = scalar_lea.vmem %s0, %s212
      %p214 = pneg %p52
      %p215 = pneg %p49
      %p216 = pneg %p73
      %p217 = pneg %p70
      %p218 = pneg %p94
      %p219 = pneg %p91
      %p220 = pneg %p115
      %p221 = pneg %p112
      %p222 = pneg %p136
      %p223 = pneg %p133
      %p224 = pneg %p157
      %p225 = pneg %p154
      %s226 = smul.u32 2, %s22
      %p227 = scmp.lt.s32.totalorder %s21, 1
      %s228 = scalar_select %p227, %s21, 1
      %p229 = scmp.lt.s32.totalorder %s226, 1
      %s230 = scalar_select %p229, %s226, 1
      %s231 = smul.addr %s228, 2
      %s232 = sadd.s32 %s230, %s231
      %s233 = smul.addr %s232, 4
      %s234 = scalar_lea.vmem %s0, %s233
      %s235 = smul.u32 2, %s22
      %p237 = scmp.eq.s32.totalorder %s21, 0
      %p238 = scmp.eq.s32.totalorder %s22, 0
      %p239 = pnand %p237, %p238
      %p240 = pneg %p239
      // Predicated region
      $region37: #{tpu_custom_call.1} parent=35 // pred_check
        _
      $region38: #{tpu_custom_call.1} parent=35 // pred_check_branch
        %242 = sbr.rel (%p239) target = $region40
      $region39: #{tpu_custom_call.1} parent=35 // pred_region
        %vm243 = vcmask 7168
        %244 = vst.msk [vmem:[%s4] sm:$0xff] %vm243, 0.0
        %245 = vst.msk [vmem:[%s4 + $0x8] sm:$0xff] %vm243, 0.0
        %246 = vst.msk [vmem:[%s5] sm:$0xff] %vm243, 0.0
        %247 = vst.msk [vmem:[%s5 + $0x8] sm:$0xff] %vm243, 0.0
      $region40: #{tpu_custom_call.1} parent=35 // pred_fallthru
        _
      %v248 = vld [vmem:[%s234] sm:$0xff]
      %250 = vst [vmem:[#allocation1] ss:$2 sm:$0xff] %v248
      %v251 = vld.sshfl [vmem:[#allocation1] sm:$0xff pattern:$0x75316420]
      %v252 = vld.sshfl [vmem:[#allocation1 + $0x8] sm:$0xff pattern:$0x75316420]
      %v255 = vpack.c.bf16 %v251, %v251
      %v256 = vpack.c.bf16 %v252, %v252
      %v257 = vld [vmem:[%s1] sm:$0xf]
      %v258 = vld [vmem:[%s2] sm:$0xff]
      %260 = vset.pattern.permute.xlu0 0
      %261 = vperm.xlu0 %260, %v258
      %v262 = vpop.permute.xlu0 %261
      %vm264 = vcmask 31744
      %v266 = vsel %vm264, %v257, 0
      %vm268 = vcmask 1041408
      %v270 = vsel %vm268, %v255, 0
      %v273 = vsel %vm268, %v256, 0
      %275 = vmatpush.bf16.msra.mxu0 0
      %276 = vmatpush.bf16.msra.mxu0 0
      %277 = vmatpush.bf16.msra.mxu0 0
      %278 = vmatpush.bf16.msra.mxu0 0
      %279 = vmatpush.bf16.msra.mxu0 0
      %280 = vmatpush.bf16.msra.mxu0 0
      %281 = vmatpush.bf16.msra.mxu0 0
      %282 = vmatpush.bf16.msra.mxu0 %v270
      %283 = vmatmul.bf16.gmra.mxu0 %v266
      %v284 = vpop.f32.mrf.mxu0
      %v285 = vadd.f32 %v262, %v284
      %v286 = vpop.f32.mrf.mxu0
      %287 = vdwg.mxu0
      %288 = vmatpush.bf16.msra.mxu0 0
      %289 = vmatpush.bf16.msra.mxu0 0
      %290 = vmatpush.bf16.msra.mxu0 0
      %291 = vmatpush.bf16.msra.mxu0 0
      %292 = vmatpush.bf16.msra.mxu0 0
      %293 = vmatpush.bf16.msra.mxu0 0
      %294 = vmatpush.bf16.msra.mxu0 0
      %295 = vmatpush.bf16.msra.mxu0 %v273
      %296 = vmatmul.bf16.gmra.mxu0 %v266
      %v297 = vpop.f32.mrf.mxu0
      %v298 = vadd.f32 %v262, %v297
      %v299 = vpop.f32.mrf.mxu0
      %300 = vdwg.mxu0
      %v301 = vmul.f32 %v285, 0.2
      %v302 = vmul.f32 %v298, 0.2
      %v303 = vmax.f32 %v285, %v301
      %v304 = vmax.f32 %v298, %v302
      %v305 = vld [vmem:[%s3] sm:$0xf]
      %v306 = vld [vmem:[%s3 + $0x4] sm:$0xf]
      %v307 = vpack.c.bf16 %v303, %v303
      %v308 = vpack.c.bf16 %v304, %v304
      %v311 = vunpack.c.l.b16 %v305
      %v312 = vunpack.c.l.b16 %v306
      %v313 = vpack.c.b16 %v312, %v311
      %vm314 = vcmask 64512
      %v316 = vsel %vm314, %v313, 0
      %vm318 = vcmask 1043456
      %v320 = vsel %vm318, %v307, 0
      %v323 = vsel %vm318, %v308, 0
      %325 = vmatpush.bf16.msra.mxu0 0
      %326 = vmatpush.bf16.msra.mxu0 0
      %327 = vmatpush.bf16.msra.mxu0 0
      %328 = vmatpush.bf16.msra.mxu0 0
      %329 = vmatpush.bf16.msra.mxu0 0
      %330 = vmatpush.bf16.msra.mxu0 0
      %331 = vmatpush.bf16.msra.mxu0 0
      %332 = vmatpush.bf16.msra.mxu0 %v320
      %333 = vmatmul.bf16.gmra.mxu0 %v316
      %v334 = vpop.f32.mrf.mxu0
      %v335 = vadd.f32 0.0, %v334
      %v336 = vpop.f32.mrf.mxu0
      %v337 = vadd.f32 0.0, %v336
      %338 = vdwg.mxu0
      %339 = vmatpush.bf16.msra.mxu0 0
      %340 = vmatpush.bf16.msra.mxu0 0
      %341 = vmatpush.bf16.msra.mxu0 0
      %342 = vmatpush.bf16.msra.mxu0 0
      %343 = vmatpush.bf16.msra.mxu0 0
      %344 = vmatpush.bf16.msra.mxu0 0
      %345 = vmatpush.bf16.msra.mxu0 0
      %346 = vmatpush.bf16.msra.mxu0 %v323
      %347 = vmatmul.bf16.gmra.mxu0 %v316
      %v348 = vpop.f32.mrf.mxu0
      %v349 = vadd.f32 0.0, %v348
      %v350 = vpop.f32.mrf.mxu0
      %v351 = vadd.f32 0.0, %v350
      %352 = vdwg.mxu0
      %v353 = vld [vmem:[%s4] sm:$0xff]
      %v354 = vld [vmem:[%s4 + $0x8] sm:$0xff]
      %v355 = vadd.f32 %v335, %v349
      %356 = vadd.xlane.f32.xlu0 %v355
      %v357 = vpop.xlane.xlu0 %356
      %v358 = vadd.f32 %v337, %v351
      %359 = vadd.xlane.f32.xlu0 %v358
      %v360 = vpop.xlane.xlu0 %359
      %v361 = vadd.f32 %v353, %v357
      %v362 = vadd.f32 %v354, %v360
      %vm363 = vcmask 7168
      %364 = vst.msk [vmem:[%s4] sm:$0xff] %vm363, %v361
      %365 = vst.msk [vmem:[%s4 + $0x8] sm:$0xff] %vm363, %v362
      %v366 = vld [vmem:[%s5] sm:$0xff]
      %v367 = vld [vmem:[%s5 + $0x8] sm:$0xff]
      %v368 = vmul.f32 %v335, %v335
      %v369 = vmul.f32 %v349, %v349
      %v370 = vmul.f32 %v337, %v337
      %v371 = vmul.f32 %v351, %v351
      %v372 = vadd.f32 %v368, %v369
      %373 = vadd.xlane.f32.xlu0 %v372
      %v374 = vpop.xlane.xlu0 %373
      %v375 = vadd.f32 %v370, %v371
      %376 = vadd.xlane.f32.xlu0 %v375
      %v377 = vpop.xlane.xlu0 %376
      %v378 = vadd.f32 %v366, %v374
      %v379 = vadd.f32 %v367, %v377
      %380 = vst.msk [vmem:[%s5] sm:$0xff] %vm363, %v378
      %381 = vst.msk [vmem:[%s5 + $0x8] sm:$0xff] %vm363, %v379
      // Predicated region
      $region41: #{tpu_custom_call.1} parent=35 // pred_check
        %p382 = pneg %p133
      $region42: #{tpu_custom_call.1} parent=35 // pred_check_branch
        %384 = sbr.rel (%p382) target = $region44
      $region43: #{tpu_custom_call.1} parent=35 // pred_region
        _
      $region44: #{tpu_custom_call.1} parent=35 // pred_fallthru
        _
      // Predicated region
      $region45: #{tpu_custom_call.1} parent=35 // pred_check
        %p385 = pneg %p154
      $region46: #{tpu_custom_call.1} parent=35 // pred_check_branch
        %387 = sbr.rel (%p385) target = $region48
      $region47: #{tpu_custom_call.1} parent=35 // pred_region
        _
      $region48: #{tpu_custom_call.1} parent=35 // pred_fallthru
        _
      // Predicated region
      $region49: #{tpu_custom_call.1} parent=35 // pred_check
        %p388 = pneg %p133
      $region50: #{tpu_custom_call.1} parent=35 // pred_check_branch
        %390 = sbr.rel (%p388) target = $region52
      $region51: #{tpu_custom_call.1} parent=35 // pred_region
        _
      $region52: #{tpu_custom_call.1} parent=35 // pred_fallthru
        _
      // Predicated region
      $region53: #{tpu_custom_call.1} parent=35 // pred_check
        %p391 = pneg %p154
      $region54: #{tpu_custom_call.1} parent=35 // pred_check_branch
        %393 = sbr.rel (%p391) target = $region56
      $region55: #{tpu_custom_call.1} parent=35 // pred_region
        _
      $region56: #{tpu_custom_call.1} parent=35 // pred_fallthru
        _
    $region36: #{tpu_custom_call.1} parent=5 // pred_fallthru
      _
    %p394 = scmp.le.s32.totalorder 2, %s12
    // Predicated region
    $region57: #{tpu_custom_call.1} parent=5 // pred_check
      %p395 = pneg %p394
    $region58: #{tpu_custom_call.1} parent=5 // pred_check_branch
      %397 = sbr.rel (%p395) target = $region60
    $region59: #{tpu_custom_call.1} parent=5 // pred_region
      %s398 = ssub.s32 %s12, 2
    $region60: #{tpu_custom_call.1} parent=5 // pred_fallthru
      _
  $region6: #{tpu_custom_call.1} parent=0 // loop_footer
    %s16 = sadd.s32 1, %s12
  $region7: #{tpu_custom_call.1} parent=0 // loop_footer_branch
    %11 = sbr.rel target = $region3
  $region8: #{tpu_custom_call.1} parent=0 // loop_exit
    _

</llo_original>
